<compile_context>
chip_gen: v7x
topology: tpu7x:2x2x1
jax: 0.10.0
libtpu: 0.0.40
codegen_flags: <defaults>
</compile_context>

<pallas_src>
import jax
import jax.numpy as jnp
from jax.experimental import pallas as pl
from jax.experimental.pallas import tpu as pltpu


def highway_kernel(x_ref, w_ref, b_ref, o_ref):
    x = x_ref[...]                                   # (TILE_B, E) f32
    E = x.shape[-1]
    # Single fused matmul: (TILE_B, E) @ (E, 2E) -> (TILE_B, 2E), f32 accumulate.
    xw = jnp.dot(x.astype(w_ref.dtype), w_ref[...],
                 preferred_element_type=jnp.float32)
    xw = xw + b_ref[...]                             # bias broadcast (1, 2E)
    proj = jnp.maximum(xw[:, :E], 0.0)               # relu branch
    gate = jax.nn.sigmoid(xw[:, E:])                 # sigmoid branch (EUP)
    # Highway combine: gate*proj + (1-gate)*x  ==  x + gate*(proj - x)
    o_ref[...] = (x + gate * (proj - x)).astype(o_ref.dtype)


def prepare_highway_params(w_proj, b_proj, w_gate, b_gate,
                           compute_dtype=jnp.bfloat16):
    """One-time parameter prep (outside the per-call path).

    PyTorch nn.Linear weights are (out, in).  Fuse projection + gate into a
    single (E, 2E) matrix laid out as (in, out) so the kernel does x @ W
    directly, and fuse the biases into a (1, 2E) f32 row.
    """
    E = w_proj.shape[0]
    w_cat = jnp.concatenate([w_proj, w_gate], axis=0).T.astype(compute_dtype)  # (E, 2E)
    b_cat = jnp.concatenate([b_proj, b_gate], axis=0).reshape(1, 2 * E).astype(jnp.float32)
    return w_cat, b_cat


def highway_forward(x, w_cat, b_cat, *, tile_b=128):
    """x: (B, E) float32.  w_cat: (E, 2E).  b_cat: (1, 2E) float32."""
    B, E = x.shape
    assert w_cat.shape == (E, 2 * E) and b_cat.shape == (1, 2 * E)
    if B % tile_b != 0:
        tile_b = B                      # small / odd batches: one full block
    grid = (B // tile_b,)

    itemsize_w = jnp.dtype(w_cat.dtype).itemsize
    cost = pl.CostEstimate(
        flops=4 * B * E * E,                                   # one (B,E)x(E,2E) matmul
        transcendentals=B * E,                                 # sigmoid
        bytes_accessed=4 * B * E * 2 + itemsize_w * E * 2 * E + 4 * 2 * E,
    )

    return pl.pallas_call(
        highway_kernel,
        out_shape=jax.ShapeDtypeStruct((B, E), x.dtype),
        grid=grid,
        in_specs=[
            pl.BlockSpec((tile_b, E), lambda i: (i, 0)),       # x: streamed per tile
            pl.BlockSpec((E, 2 * E), lambda i: (0, 0)),        # fused weight: VMEM-resident
            pl.BlockSpec((1, 2 * E), lambda i: (0, 0)),        # fused bias: VMEM-resident
        ],
        out_specs=pl.BlockSpec((tile_b, E), lambda i: (i, 0)),
        compiler_params=pltpu.CompilerParams(
            dimension_semantics=("parallel",),
            vmem_limit_bytes=32 << 20,
        ),
        cost_estimate=cost,
    )(x, w_cat, b_cat)


def _xavier_uniform(key, shape):
    fan_out, fan_in = shape
    bound = (6.0 / (fan_in + fan_out)) ** 0.5
    return jax.random.uniform(key, shape, jnp.float32, -bound, bound)


if __name__ == "__main__":
    batch_size = 256            # exercises the batch grid (2 tiles of 128)
    word_embed_size = 128

    key = jax.random.PRNGKey(0)
    k_x, k_wp, k_bp, k_wg, k_bg = jax.random.split(key, 5)

    x = jax.random.normal(k_x, (batch_size, word_embed_size), jnp.float32)
    # PyTorch nn.Linear convention: weight shape (out_features, in_features).
    w_proj = _xavier_uniform(k_wp, (word_embed_size, word_embed_size))
    w_gate = _xavier_uniform(k_wg, (word_embed_size, word_embed_size))
    bb = 1.0 / (word_embed_size ** 0.5)
    b_proj = jax.random.uniform(k_bp, (word_embed_size,), jnp.float32, -bb, bb)
    b_gate = jax.random.uniform(k_bg, (word_embed_size,), jnp.float32, -bb, bb)

    # Pure-JAX f32 reference.
    proj_ref = jax.nn.relu(x @ w_proj.T + b_proj)
    gate_ref = jax.nn.sigmoid(x @ w_gate.T + b_gate)
    ref = gate_ref * proj_ref + (1.0 - gate_ref) * x

    # Default bf16-MXU path (v6e/v7x sweet spot); relaxed tolerance for bf16 dot.
    w_cat_bf16, b_cat = prepare_highway_params(w_proj, b_proj, w_gate, b_gate,
                                               compute_dtype=jnp.bfloat16)
    out_bf16 = jax.block_until_ready(highway_forward(x, w_cat_bf16, b_cat))
    assert out_bf16.shape == (batch_size, word_embed_size)
    assert jnp.allclose(out_bf16, ref, atol=5e-2, rtol=5e-2), "bf16 path mismatch"

    # Full-f32 path (exact check of kernel structure / math).
    w_cat_f32, _ = prepare_highway_params(w_proj, b_proj, w_gate, b_gate,
                                          compute_dtype=jnp.float32)
    out_f32 = jax.block_until_ready(highway_forward(x, w_cat_f32, b_cat))
    assert jnp.allclose(out_f32, ref, atol=1e-5, rtol=1e-5), "f32 path mismatch"

    print("KERNEL_OK")
</pallas_src>

<mosaic_0001>
module attributes {stable_mosaic.version = 11 : i64} {
  func.func @highway_kernel(%arg0: i32, %arg1: memref<128x128xf32, #tpu.memory_space<vmem>>, %arg2: memref<128x256xbf16, #tpu.memory_space<vmem>>, %arg3: memref<1x256xf32, #tpu.memory_space<vmem>>, %arg4: memref<128x128xf32, #tpu.memory_space<vmem>>) attributes {dimension_semantics = [#tpu.dimension_semantics<parallel>], iteration_bounds = array<i64: 2>, scalar_prefetch = 0 : i64, scratch_operands = 0 : i64, tpu.core_type = #tpu.core_type<tc>, window_params = [{transform_indices = @transform_0, window_bounds = array<i64: 128, 128>}, {pipeline_mode = #tpu.pipeline_mode<synchronous>, transform_indices = @transform_1, window_bounds = array<i64: 128, 256>}, {pipeline_mode = #tpu.pipeline_mode<synchronous>, transform_indices = @transform_2, window_bounds = array<i64: 1, 256>}, {transform_indices = @transform_3, window_bounds = array<i64: 128, 128>}]} {
    %c0 = arith.constant 0 : index
    %c0_0 = arith.constant 0 : index
    %0 = vector.load %arg1[%c0, %c0_0] : memref<128x128xf32, #tpu.memory_space<vmem>>, vector<128x128xf32>
    %1 = arith.truncf %0 : vector<128x128xf32> to vector<128x128xbf16>
    %c0_1 = arith.constant 0 : index
    %c0_2 = arith.constant 0 : index
    %2 = vector.load %arg2[%c0_1, %c0_2] : memref<128x256xbf16, #tpu.memory_space<vmem>>, vector<128x256xbf16>
    %cst = arith.constant dense<0.000000e+00> : vector<128x256xf32>
    %3 = tpu.matmul %1, %2, %cst {dimension_numbers = #tpu.dot_dimension_numbers<[1], [0], [0], [1], [0, 0, 1, 1], [], []>} : vector<128x128xbf16>, vector<128x256xbf16>, vector<128x256xf32> -> vector<128x256xf32>
    %c0_3 = arith.constant 0 : index
    %c0_4 = arith.constant 0 : index
    %4 = vector.load %arg3[%c0_3, %c0_4] : memref<1x256xf32, #tpu.memory_space<vmem>>, vector<1x256xf32>
    %5 = vector.broadcast %4 : vector<1x256xf32> to vector<128x256xf32>
    %6 = arith.addf %3, %5 : vector<128x256xf32>
    %7 = vector.extract_strided_slice %6 {offsets = [0, 0], sizes = [128, 128], strides = [1, 1]} : vector<128x256xf32> to vector<128x128xf32>
    %cst_5 = arith.constant 0.000000e+00 : f32
    %8 = vector.broadcast %cst_5 : f32 to vector<128x128xf32>
    %9 = arith.maximumf %7, %8 : vector<128x128xf32>
    %10 = vector.extract_strided_slice %6 {offsets = [0, 128], sizes = [128, 128], strides = [1, 1]} : vector<128x256xf32> to vector<128x128xf32>
    %11 = arith.negf %10 : vector<128x128xf32>
    %12 = math.exp %11 : vector<128x128xf32>
    %cst_6 = arith.constant 1.000000e+00 : f32
    %13 = vector.broadcast %cst_6 : f32 to vector<128x128xf32>
    %14 = arith.addf %13, %12 : vector<128x128xf32>
    %15 = arith.divf %13, %14 : vector<128x128xf32>
    %16 = arith.subf %9, %0 : vector<128x128xf32>
    %17 = arith.mulf %15, %16 : vector<128x128xf32>
    %18 = arith.addf %0, %17 : vector<128x128xf32>
    %c0_7 = arith.constant 0 : index
    %c0_8 = arith.constant 0 : index
    %19 = vector.load %arg4[%c0_7, %c0_8] : memref<128x128xf32, #tpu.memory_space<vmem>>, vector<128x128xf32>
    tpu.vector_store %arg4[%c0_7, %c0_8], %18 {strides = array<i32>} : memref<128x128xf32, #tpu.memory_space<vmem>>, vector<128x128xf32>,
    return
  }
  func.func @transform_0(%arg0: i32) -> (i32, i32) {
    %c0_i32 = arith.constant 0 : i32
    %c0_i32_0 = arith.constant 0 : i32
    return %arg0, %c0_i32 : i32, i32
  }
  func.func @transform_1(%arg0: i32) -> (i32, i32) {
    %c0_i32 = arith.constant 0 : i32
    %c0_i32_0 = arith.constant 0 : i32
    %c0_i32_1 = arith.constant 0 : i32
    return %c0_i32, %c0_i32_0 : i32, i32
  }
  func.func @transform_2(%arg0: i32) -> (i32, i32) {
    %c0_i32 = arith.constant 0 : i32
    %c0_i32_0 = arith.constant 0 : i32
    %c0_i32_1 = arith.constant 0 : i32
    return %c0_i32, %c0_i32_0 : i32, i32
  }
  func.func @transform_3(%arg0: i32) -> (i32, i32) {
    %c0_i32 = arith.constant 0 : i32
    %c0_i32_0 = arith.constant 0 : i32
    return %arg0, %c0_i32 : i32, i32
  }
}

</mosaic_0001>

<llo_original>
// kernel: tpu_custom_call.1
$region0: #{tpu_custom_call.1}
  #allocation0 [shape = 'u32[]', space=smem, size = 0x4, offset = 0x4, fixed_abs, tag = 'smem constant byte address 0x4 - core index']
  #allocation1 [shape = 'u32[144,128]{1,0:T(1,128)}', space=vmem, size = 0x12000, scoped, tag = 'internal scratch']
  %s0 = inlined_call_operand.hbm [shape: f32[256,128], index: 0, kind: input, shape index: {}]
  %s1 = inlined_call_operand.hbm [shape: bf16[128,256], index: 1, kind: input, shape index: {}]
  %s2 = inlined_call_operand.vmem [shape: f32[1,256], index: 2, kind: input, shape index: {}]
  %s3 = inlined_call_operand.hbm [shape: f32[256,128], index: 3, kind: output, shape index: {}]
  %s4 = sld [smem:[#allocation0]]
  $region53: #{tpu_custom_call.1} parent=0
    _
  %s6 = ssub.s32 1, %s4
  %s7 = scalar_select 0, %s6, %s4
  $region1: #{tpu_custom_call.1} parent=0
    #allocation2 [shape = 'u8[131072]{0}', space=vmem, size = 0x20000, scoped, tag = 'input window, operand 0']
    #allocation3 [shape = 's32[2]{0}', space=sflag, size = 0x8, scoped, tag = 'scoped memory for tpu_custom_call.1']
    #allocation4 [shape = 's32[2]{0}', space=sflag, size = 0x8, scoped, tag = 'scoped memory for tpu_custom_call.1']
    #allocation5 [shape = 'u8[65536]{0}', space=vmem, size = 0x10000, scoped, tag = 'input window, operand 1, single buffered']
    #allocation6 [shape = 's32[1]{0}', space=sflag, size = 0x4, scoped, tag = 'scoped memory for tpu_custom_call.1']
    #allocation7 [shape = 'u8[131072]{0}', space=vmem, size = 0x20000, scoped, tag = 'output window, operand 0']
    %8 = vsyncpa [#allocation3], 0
    %s9 = scalar_lea.sflag [#allocation3], 1
    %10 = vsyncpa %s9, 0
    %11 = vsyncpa [#allocation6], 0
    %12 = vsyncpa [#allocation4], 0
    %s13 = scalar_lea.sflag [#allocation4], 1
    %14 = vsyncpa %s13, 0
    loop: start=0, step=1, limit=4
    $region2: #{tpu_custom_call.1} parent=1 // loop_pre_header
      _
    $region3: #{tpu_custom_call.1} parent=1 // loop_header
      %s16 = sphi 0, %s20
      %p17 = scmp.ge.s32.totalorder %s16, 4
      %s26 = sphi 0, %s28
      %s29 = sphi 0, %s26
      %s30 = sphi 0, %s29
      %s46 = sphi 0, %s30
      %s50 = sphi 0, %s50
      %s52 = sphi 0, %s50
      %s53 = sphi 0, %s52
      %s67 = sphi 0, %s53
      %s71 = sphi 0, %s71
      %s73 = sphi 0, %s71
      %s74 = sphi 0, %s73
      %s88 = sphi 0, %s74
      %s94 = sphi 0, %s96
      %s97 = sphi 0, %s94
      %s98 = sphi 0, %s97
      %s114 = sphi 0, %s98
    $region4: #{tpu_custom_call.1} parent=1 // loop_header_branch
      %19 = sbr.rel (%p17) target = $region8
    $region5: #{tpu_custom_call.1} parent=1 // loop_body
      %s21 = ssub.s32 %s16, 1
      %s22 = ssub.s32 %s16, 2
      %s23 = sadd.s32 %s16, 1
      %s24 = ssub.s32 %s16, %s23
      %p25 = scmp.eq.s32.totalorder %s24, 0
      %s27 = sadd.s32 %s26, 1
      %s28 = scalar_select %p25, %s26, %s27
      %p31 = pneg %p25
      %p32 = scmp.eq.s32.totalorder %s16, 1
      %p33 = por %p31, %p32
      %p34 = scmp.ne.s32.totalorder %s26, %s29
      %p35 = scmp.eq.s32.totalorder %s16, 0
      %p36 = por %p34, %p35
      %p37 = scmp.ne.s32.totalorder %s26, %s29
      %p38 = scmp.eq.s32.totalorder %s21, 1
      %p39 = por %p37, %p38
      %p40 = scmp.ne.s32.totalorder %s29, %s30
      %p41 = scmp.eq.s32.totalorder %s21, 0
      %p42 = por %p40, %p41
      %p43 = scmp.ne.s32.totalorder %s29, %s30
      %p44 = scmp.eq.s32.totalorder %s22, 1
      %p45 = por %p43, %p44
      %p47 = scmp.ne.s32.totalorder %s30, %s46
      %p48 = scmp.eq.s32.totalorder %s22, 0
      %p49 = por %p47, %p48
      %s51 = sadd.s32 %s50, 1
      %p54 = scmp.eq.s32.totalorder %s16, 1
      %p55 = scmp.ne.s32.totalorder %s50, %s52
      %p56 = scmp.eq.s32.totalorder %s16, 0
      %p57 = por %p55, %p56
      %p58 = scmp.ne.s32.totalorder %s50, %s52
      %p59 = scmp.eq.s32.totalorder %s21, 1
      %p60 = por %p58, %p59
      %p61 = scmp.ne.s32.totalorder %s52, %s53
      %p62 = scmp.eq.s32.totalorder %s21, 0
      %p63 = por %p61, %p62
      %p64 = scmp.ne.s32.totalorder %s52, %s53
      %p65 = scmp.eq.s32.totalorder %s22, 1
      %p66 = por %p64, %p65
      %p68 = scmp.ne.s32.totalorder %s53, %s67
      %p69 = scmp.eq.s32.totalorder %s22, 0
      %p70 = por %p68, %p69
      %s72 = sadd.s32 %s71, 1
      %p75 = scmp.eq.s32.totalorder %s16, 1
      %p76 = scmp.ne.s32.totalorder %s71, %s73
      %p77 = scmp.eq.s32.totalorder %s16, 0
      %p78 = por %p76, %p77
      %p79 = scmp.ne.s32.totalorder %s71, %s73
      %p80 = scmp.eq.s32.totalorder %s21, 1
      %p81 = por %p79, %p80
      %p82 = scmp.ne.s32.totalorder %s73, %s74
      %p83 = scmp.eq.s32.totalorder %s21, 0
      %p84 = por %p82, %p83
      %p85 = scmp.ne.s32.totalorder %s73, %s74
      %p86 = scmp.eq.s32.totalorder %s22, 1
      %p87 = por %p85, %p86
      %p89 = scmp.ne.s32.totalorder %s74, %s88
      %p90 = scmp.eq.s32.totalorder %s22, 0
      %p91 = por %p89, %p90
      %s92 = ssub.s32 %s16, %s23
      %p93 = scmp.eq.s32.totalorder %s92, 0
      %s95 = sadd.s32 %s94, 1
      %s96 = scalar_select %p93, %s94, %s95
      %p99 = pneg %p93
      %p100 = scmp.eq.s32.totalorder %s16, 1
      %p101 = por %p99, %p100
      %p102 = scmp.ne.s32.totalorder %s94, %s97
      %p103 = scmp.eq.s32.totalorder %s16, 0
      %p104 = por %p102, %p103
      %p105 = scmp.ne.s32.totalorder %s94, %s97
      %p106 = scmp.eq.s32.totalorder %s21, 1
      %p107 = por %p105, %p106
      %p108 = scmp.ne.s32.totalorder %s97, %s98
      %p109 = scmp.eq.s32.totalorder %s21, 0
      %p110 = por %p108, %p109
      %p111 = scmp.ne.s32.totalorder %s97, %s98
      %p112 = scmp.eq.s32.totalorder %s22, 1
      %p113 = por %p111, %p112
      %p115 = scmp.ne.s32.totalorder %s98, %s114
      %p116 = scmp.eq.s32.totalorder %s22, 0
      %p117 = por %p115, %p116
      %p118 = scmp.le.s32.totalorder 1, %s16
      %p119 = scmp.lt.s32.totalorder %s16, 3
      %p120 = pnand %p118, %p119
      %p121 = pneg %p120
      // Predicated region
      $region9: #{tpu_custom_call.1} parent=5 // pred_check
        _
      $region10: #{tpu_custom_call.1} parent=5 // pred_check_branch
        %123 = sbr.rel (%p120) target = $region12
      $region11: #{tpu_custom_call.1} parent=5 // pred_region
        %s124 = ssub.s32 %s16, 1
        // Predicated region
        $region13: #{tpu_custom_call.1} parent=11 // pred_check
          %p125 = pneg %p63
        $region14: #{tpu_custom_call.1} parent=11 // pred_check_branch
          %127 = sbr.rel (%p125) target = $region16
        $region15: #{tpu_custom_call.1} parent=11 // pred_region
          %s129 = ssub.s32 2048, 2048
          %130 = vsyncadd [#allocation6], %s129
          %s131 = sshll.u32 [#allocation5], 4
          %s132 = int_to_ptr.vmem [resolvable:$true] %s131
          %137 = dma.hbm_to_vmem [thread:$0]  %s1, 2048, %s132, [#allocation6], 128, 128, 8
        $region16: #{tpu_custom_call.1} parent=11 // pred_fallthru
          _
        // Predicated region
        $region17: #{tpu_custom_call.1} parent=11 // pred_check
          %p138 = pneg %p84
        $region18: #{tpu_custom_call.1} parent=11 // pred_check_branch
          %140 = sbr.rel (%p138) target = $region20
        $region19: #{tpu_custom_call.1} parent=11 // pred_region
          _
        $region20: #{tpu_custom_call.1} parent=11 // pred_fallthru
          _
      $region12: #{tpu_custom_call.1} parent=5 // pred_fallthru
        _
      %p141 = scmp.lt.s32.totalorder %s16, 2
      // Predicated region
      $region21: #{tpu_custom_call.1} parent=5 // pred_check
        %p142 = pneg %p141
      $region22: #{tpu_custom_call.1} parent=5 // pred_check_branch
        %144 = sbr.rel (%p142) target = $region24
      $region23: #{tpu_custom_call.1} parent=5 // pred_region
        // Predicated region
        $region25: #{tpu_custom_call.1} parent=23 // pred_check
          %p145 = pneg %p36
        $region26: #{tpu_custom_call.1} parent=23 // pred_check_branch
          %147 = sbr.rel (%p145) target = $region28
        $region27: #{tpu_custom_call.1} parent=23 // pred_region
          %s148 = sand.u32 %s26, 1
          %s149 = scalar_lea.sflag [#allocation3], %s148
          %s150 = sand.u32 %s26, 1
          %s151 = smul.addr %s150, 128
          %s152 = scalar_lea.vmem [#allocation2], %s151
          %s153 = smul.u32 16, %s16
          %s155 = ssub.s32 2048, 2048
          %156 = vsyncadd %s149, %s155
          %s157 = smul.addr %s153, 128
          %s158 = scalar_lea.hbm %s0, %s157
          %s159 = sshll.u32 %s152, 4
          %s160 = int_to_ptr.vmem [resolvable:$true] %s159
          %165 = dma.hbm_to_vmem [thread:$0]  %s158, 2048, %s160, %s149, 128, 128, 8
        $region28: #{tpu_custom_call.1} parent=23 // pred_fallthru
          _
      $region24: #{tpu_custom_call.1} parent=5 // pred_fallthru
        _
      %p166 = scmp.le.s32.totalorder 1, %s16
      %p167 = scmp.lt.s32.totalorder %s16, 3
      %p168 = pnand %p166, %p167
      %p169 = pneg %p168
      // Predicated region
      $region29: #{tpu_custom_call.1} parent=5 // pred_check
        _
      $region30: #{tpu_custom_call.1} parent=5 // pred_check_branch
        %171 = sbr.rel (%p168) target = $region32
      $region31: #{tpu_custom_call.1} parent=5 // pred_region
        %s172 = ssub.s32 %s16, 1
        %s173 = sand.u32 %s29, 1
        %s174 = scalar_lea.sflag [#allocation3], %s173
        %s175 = sand.u32 %s29, 1
        %s176 = smul.addr %s175, 128
        %s177 = scalar_lea.vmem [#allocation2], %s176
        // Predicated region
        $region33: #{tpu_custom_call.1} parent=31 // pred_check
          %p178 = pneg %p42
        $region34: #{tpu_custom_call.1} parent=31 // pred_check_branch
          %180 = sbr.rel (%p178) target = $region36
        $region35: #{tpu_custom_call.1} parent=31 // pred_region
          %181 = dma.done %s174, 2048
        $region36: #{tpu_custom_call.1} parent=31 // pred_fallthru
          _
        // Predicated region
        $region37: #{tpu_custom_call.1} parent=31 // pred_check
          %p182 = pneg %p63
        $region38: #{tpu_custom_call.1} parent=31 // pred_check_branch
          %184 = sbr.rel (%p182) target = $region40
        $region39: #{tpu_custom_call.1} parent=31 // pred_region
          %185 = dma.done [#allocation6], 2048
        $region40: #{tpu_custom_call.1} parent=31 // pred_fallthru
          _
        %s186 = sand.u32 %s29, 1
        %s187 = scalar_lea.sflag [#allocation3], %s186
        %s188 = sand.u32 %s29, 1
        %s189 = smul.addr %s188, 128
        %s190 = scalar_lea.vmem [#allocation2], %s189
        %p191 = pneg %p42
        %p192 = pneg %p39
        %p193 = pneg %p63
        %p194 = pneg %p60
        %p195 = pneg %p84
        %p196 = pneg %p81
        %p197 = pneg %p110
        %p198 = pneg %p107
        %s199 = sand.u32 %s97, 1
        %s200 = scalar_lea.sflag [#allocation4], %s199
        %s201 = sand.u32 %s97, 1
        %s202 = smul.addr %s201, 128
        %s203 = scalar_lea.vmem [#allocation7], %s202
        %s204 = smul.u32 16, %s21
        %s205 = smul.u32 16, %s21
        %v207 = vld [vmem:[%s177] sm:$0xff]
        %v208 = vld [vmem:[%s177 + $0x8] sm:$0xff]
        %v209 = vld [vmem:[%s177 + $0x10] sm:$0xff]
        %v210 = vld [vmem:[%s177 + $0x18] sm:$0xff]
        %v211 = vld [vmem:[%s177 + $0x20] sm:$0xff]
        %v212 = vld [vmem:[%s177 + $0x28] sm:$0xff]
        %v213 = vld [vmem:[%s177 + $0x30] sm:$0xff]
        %v214 = vld [vmem:[%s177 + $0x38] sm:$0xff]
        %v215 = vld [vmem:[%s177 + $0x40] sm:$0xff]
        %v216 = vld [vmem:[%s177 + $0x48] sm:$0xff]
        %v217 = vld [vmem:[%s177 + $0x50] sm:$0xff]
        %v218 = vld [vmem:[%s177 + $0x58] sm:$0xff]
        %v219 = vld [vmem:[%s177 + $0x60] sm:$0xff]
        %v220 = vld [vmem:[%s177 + $0x68] sm:$0xff]
        %v221 = vld [vmem:[%s177 + $0x70] sm:$0xff]
        %v222 = vld [vmem:[%s177 + $0x78] sm:$0xff]
        %v223 = vpack.c.bf16 %v208, %v207
        %v224 = vpack.c.bf16 %v210, %v209
        %v225 = vpack.c.bf16 %v212, %v211
        %v226 = vpack.c.bf16 %v214, %v213
        %v227 = vpack.c.bf16 %v216, %v215
        %v228 = vpack.c.bf16 %v218, %v217
        %v229 = vpack.c.bf16 %v220, %v219
        %v230 = vpack.c.bf16 %v222, %v221
        %v231 = vld [vmem:[#allocation5] sm:$0xff]
        %v232 = vld [vmem:[#allocation5 + $0x8] sm:$0xff]
        %v233 = vld [vmem:[#allocation5 + $0x10] sm:$0xff]
        %v234 = vld [vmem:[#allocation5 + $0x18] sm:$0xff]
        %v235 = vld [vmem:[#allocation5 + $0x20] sm:$0xff]
        %v236 = vld [vmem:[#allocation5 + $0x28] sm:$0xff]
        %v237 = vld [vmem:[#allocation5 + $0x30] sm:$0xff]
        %v238 = vld [vmem:[#allocation5 + $0x38] sm:$0xff]
        %v239 = vld [vmem:[#allocation5 + $0x40] sm:$0xff]
        %v240 = vld [vmem:[#allocation5 + $0x48] sm:$0xff]
        %v241 = vld [vmem:[#allocation5 + $0x50] sm:$0xff]
        %v242 = vld [vmem:[#allocation5 + $0x58] sm:$0xff]
        %v243 = vld [vmem:[#allocation5 + $0x60] sm:$0xff]
        %v244 = vld [vmem:[#allocation5 + $0x68] sm:$0xff]
        %v245 = vld [vmem:[#allocation5 + $0x70] sm:$0xff]
        %v246 = vld [vmem:[#allocation5 + $0x78] sm:$0xff]
        %v247 = vld [vmem:[%s2] sm:$0x3]
        %v249 = vlaneseq
        %v250 = vshrl.u32 %v249, 7
        %v251 = vsub.s32 0, %v250
        %v252 = vrot.slane %v247, %v251
        %v253 = vlaneseq
        %v254 = vshrl.u32 %v253, 7
        %v255 = vsub.s32 1, %v254
        %v256 = vrot.slane %v247, %v255
        %v275 = vunpack.c.l.b16 %v231
        %v276 = vunpack.c.h.b16 %v231
        %v277 = vunpack.c.l.b16 %v232
        %v278 = vunpack.c.h.b16 %v232
        %v279 = vunpack.c.l.b16 %v233
        %v280 = vunpack.c.h.b16 %v233
        %v281 = vunpack.c.l.b16 %v234
        %v282 = vunpack.c.h.b16 %v234
        %v283 = vunpack.c.l.b16 %v235
        %v284 = vunpack.c.h.b16 %v235
        %v285 = vunpack.c.l.b16 %v236
        %v286 = vunpack.c.h.b16 %v236
        %v287 = vunpack.c.l.b16 %v237
        %v288 = vunpack.c.h.b16 %v237
        %v289 = vunpack.c.l.b16 %v238
        %v290 = vunpack.c.h.b16 %v238
        %v291 = vunpack.c.l.b16 %v239
        %v292 = vunpack.c.h.b16 %v239
        %v293 = vunpack.c.l.b16 %v240
        %v294 = vunpack.c.h.b16 %v240
        %v295 = vunpack.c.l.b16 %v241
        %v296 = vunpack.c.h.b16 %v241
        %v297 = vunpack.c.l.b16 %v242
        %v298 = vunpack.c.h.b16 %v242
        %v299 = vunpack.c.l.b16 %v243
        %v300 = vunpack.c.h.b16 %v243
        %v301 = vunpack.c.l.b16 %v244
        %v302 = vunpack.c.h.b16 %v244
        %v303 = vunpack.c.l.b16 %v245
        %v304 = vunpack.c.h.b16 %v245
        %v305 = vunpack.c.l.b16 %v246
        %v306 = vunpack.c.h.b16 %v246
        %v307 = vpack.c.b16 %v277, %v275
        %v308 = vpack.c.b16 %v278, %v276
        %v309 = vpack.c.b16 %v281, %v279
        %v310 = vpack.c.b16 %v282, %v280
        %v311 = vpack.c.b16 %v285, %v283
        %v312 = vpack.c.b16 %v286, %v284
        %v313 = vpack.c.b16 %v289, %v287
        %v314 = vpack.c.b16 %v290, %v288
        %v315 = vpack.c.b16 %v293, %v291
        %v316 = vpack.c.b16 %v294, %v292
        %v317 = vpack.c.b16 %v297, %v295
        %v318 = vpack.c.b16 %v298, %v296
        %v319 = vpack.c.b16 %v301, %v299
        %v320 = vpack.c.b16 %v302, %v300
        %v321 = vpack.c.b16 %v305, %v303
        %v322 = vpack.c.b16 %v306, %v304
        %339 = vmatprep.subr.bf16.mxu0 %v308
        %340 = vmatpush1.bf16.msra.mxu0 %v307
        %341 = vmatprep.subr.bf16.mxu0 %v310
        %342 = vmatpush1.bf16.msra.mxu0 %v309
        %343 = vmatprep.subr.bf16.mxu0 %v312
        %344 = vmatpush1.bf16.msra.mxu0 %v311
        %345 = vmatprep.subr.bf16.mxu0 %v314
        %346 = vmatpush1.bf16.msra.mxu0 %v313
        %347 = vmatprep.subr.bf16.mxu0 %v316
        %348 = vmatpush1.bf16.msra.mxu0 %v315
        %349 = vmatprep.subr.bf16.mxu0 %v318
        %350 = vmatpush1.bf16.msra.mxu0 %v317
        %351 = vmatprep.subr.bf16.mxu0 %v320
        %352 = vmatpush1.bf16.msra.mxu0 %v319
        %353 = vmatprep.subr.bf16.mxu0 %v322
        %354 = vmatpush1.bf16.msra.mxu0 %v321
        %355 = vmatprep.subr.bf16.mxu0 0
        %356 = vmatpush1.bf16.msra.mxu0 0
        %357 = vmatprep.subr.bf16.mxu0 0
        %358 = vmatpush1.bf16.msra.mxu0 0
        %359 = vmatprep.subr.bf16.mxu0 0
        %360 = vmatpush1.bf16.msra.mxu0 0
        %361 = vmatprep.subr.bf16.mxu0 0
        %362 = vmatpush1.bf16.msra.mxu0 0
        %363 = vmatprep.subr.bf16.mxu0 0
        %364 = vmatpush1.bf16.msra.mxu0 0
        %365 = vmatprep.subr.bf16.mxu0 0
        %366 = vmatpush1.bf16.msra.mxu0 0
        %367 = vmatprep.subr.bf16.mxu0 0
        %368 = vmatpush1.bf16.msra.mxu0 0
        %369 = vmatprep.subr.bf16.mxu0 0
        %370 = vmatpush1.bf16.msra.mxu0 0
        %371 = vmatprep.mubr.bf16.mxu0 0
        %372 = vmatmul.mubr.bf16.gmra.mrb[0].mxu0 %v223
        %v373 = vpop.f32.mrb[0].mxu0
        %v374 = vadd.f32 %v252, %v373
        %v375 = vpop.f32.mrb[0].mxu0
        %v376 = vadd.f32 %v256, %v375
        %v377 = vpop.f32.mrb[0].mxu0
        %v378 = vadd.f32 %v252, %v377
        %v379 = vpop.f32.mrb[0].mxu0
        %v380 = vadd.f32 %v256, %v379
        %381 = vmatprep.mubr.bf16.mxu0 0
        %382 = vmatmul.mubr.bf16.gmra.mrb[0].mxu0 %v224
        %v383 = vpop.f32.mrb[0].mxu0
        %v384 = vadd.f32 %v252, %v383
        %v385 = vpop.f32.mrb[0].mxu0
        %v386 = vadd.f32 %v256, %v385
        %v387 = vpop.f32.mrb[0].mxu0
        %v388 = vadd.f32 %v252, %v387
        %v389 = vpop.f32.mrb[0].mxu0
        %v390 = vadd.f32 %v256, %v389
        %391 = vmatprep.mubr.bf16.mxu0 0
        %392 = vmatmul.mubr.bf16.gmra.mrb[0].mxu0 %v225
        %v393 = vpop.f32.mrb[0].mxu0
        %v394 = vadd.f32 %v252, %v393
        %v395 = vpop.f32.mrb[0].mxu0
        %v396 = vadd.f32 %v256, %v395
        %v397 = vpop.f32.mrb[0].mxu0
        %v398 = vadd.f32 %v252, %v397
        %v399 = vpop.f32.mrb[0].mxu0
        %v400 = vadd.f32 %v256, %v399
        %401 = vmatprep.mubr.bf16.mxu0 0
        %402 = vmatmul.mubr.bf16.gmra.mrb[0].mxu0 %v226
        %v403 = vpop.f32.mrb[0].mxu0
        %v404 = vadd.f32 %v252, %v403
        %v405 = vpop.f32.mrb[0].mxu0
        %v406 = vadd.f32 %v256, %v405
        %v407 = vpop.f32.mrb[0].mxu0
        %v408 = vadd.f32 %v252, %v407
        %v409 = vpop.f32.mrb[0].mxu0
        %v410 = vadd.f32 %v256, %v409
        %411 = vmatprep.mubr.bf16.mxu0 0
        %412 = vmatmul.mubr.bf16.gmra.mrb[0].mxu0 %v227
        %v413 = vpop.f32.mrb[0].mxu0
        %v414 = vadd.f32 %v252, %v413
        %v415 = vpop.f32.mrb[0].mxu0
        %v416 = vadd.f32 %v256, %v415
        %v417 = vpop.f32.mrb[0].mxu0
        %v418 = vadd.f32 %v252, %v417
        %v419 = vpop.f32.mrb[0].mxu0
        %v420 = vadd.f32 %v256, %v419
        %421 = vmatprep.mubr.bf16.mxu0 0
        %422 = vmatmul.mubr.bf16.gmra.mrb[0].mxu0 %v228
        %v423 = vpop.f32.mrb[0].mxu0
        %v424 = vadd.f32 %v252, %v423
        %v425 = vpop.f32.mrb[0].mxu0
        %v426 = vadd.f32 %v256, %v425
        %v427 = vpop.f32.mrb[0].mxu0
        %v428 = vadd.f32 %v252, %v427
        %v429 = vpop.f32.mrb[0].mxu0
        %v430 = vadd.f32 %v256, %v429
        %431 = vmatprep.mubr.bf16.mxu0 0
        %432 = vmatmul.mubr.bf16.gmra.mrb[0].mxu0 %v229
        %v433 = vpop.f32.mrb[0].mxu0
        %v434 = vadd.f32 %v252, %v433
        %v435 = vpop.f32.mrb[0].mxu0
        %v436 = vadd.f32 %v256, %v435
        %v437 = vpop.f32.mrb[0].mxu0
        %v438 = vadd.f32 %v252, %v437
        %v439 = vpop.f32.mrb[0].mxu0
        %v440 = vadd.f32 %v256, %v439
        %441 = vmatprep.mubr.bf16.mxu0 0
        %442 = vmatmul.mubr.bf16.gmra.mrb[0].mxu0 %v230
        %v443 = vpop.f32.mrb[0].mxu0
        %v444 = vadd.f32 %v252, %v443
        %v445 = vpop.f32.mrb[0].mxu0
        %v446 = vadd.f32 %v256, %v445
        %v447 = vpop.f32.mrb[0].mxu0
        %v448 = vadd.f32 %v252, %v447
        %v449 = vpop.f32.mrb[0].mxu0
        %v450 = vadd.f32 %v256, %v449
        %451 = vdwg.mxu0
        %v452 = vmax.f32 %v374, 0.0
        %v453 = vmax.f32 %v378, 0.0
        %v454 = vmax.f32 %v384, 0.0
        %v455 = vmax.f32 %v388, 0.0
        %v456 = vmax.f32 %v394, 0.0
        %v457 = vmax.f32 %v398, 0.0
        %v458 = vmax.f32 %v404, 0.0
        %v459 = vmax.f32 %v408, 0.0
        %v460 = vmax.f32 %v414, 0.0
        %v461 = vmax.f32 %v418, 0.0
        %v462 = vmax.f32 %v424, 0.0
        %v463 = vmax.f32 %v428, 0.0
        %v464 = vmax.f32 %v434, 0.0
        %v465 = vmax.f32 %v438, 0.0
        %v466 = vmax.f32 %v444, 0.0
        %v467 = vmax.f32 %v448, 0.0
        %v468 = vxor.u32 %v376, 2147483648
        %v469 = vxor.u32 %v380, 2147483648
        %v470 = vxor.u32 %v386, 2147483648
        %v471 = vxor.u32 %v390, 2147483648
        %v472 = vxor.u32 %v396, 2147483648
        %v473 = vxor.u32 %v400, 2147483648
        %v474 = vxor.u32 %v406, 2147483648
        %v475 = vxor.u32 %v410, 2147483648
        %v476 = vxor.u32 %v416, 2147483648
        %v477 = vxor.u32 %v420, 2147483648
        %v478 = vxor.u32 %v426, 2147483648
        %v479 = vxor.u32 %v430, 2147483648
        %v480 = vxor.u32 %v436, 2147483648
        %v481 = vxor.u32 %v440, 2147483648
        %v482 = vxor.u32 %v446, 2147483648
        %v483 = vxor.u32 %v450, 2147483648
        %v484 = vmul.f32 %v468, 1.442695
        %v485 = vpow.pop %v484
        %v486 = vmul.f32 %v469, 1.442695
        %v487 = vpow.pop %v486
        %v488 = vmul.f32 %v470, 1.442695
        %v489 = vpow.pop %v488
        %v490 = vmul.f32 %v471, 1.442695
        %v491 = vpow.pop %v490
        %v492 = vmul.f32 %v472, 1.442695
        %v493 = vpow.pop %v492
        %v494 = vmul.f32 %v473, 1.442695
        %v495 = vpow.pop %v494
        %v496 = vmul.f32 %v474, 1.442695
        %v497 = vpow.pop %v496
        %v498 = vmul.f32 %v475, 1.442695
        %v499 = vpow.pop %v498
        %v500 = vmul.f32 %v476, 1.442695
        %v501 = vpow.pop %v500
        %v502 = vmul.f32 %v477, 1.442695
        %v503 = vpow.pop %v502
        %v504 = vmul.f32 %v478, 1.442695
        %v505 = vpow.pop %v504
        %v506 = vmul.f32 %v479, 1.442695
        %v507 = vpow.pop %v506
        %v508 = vmul.f32 %v480, 1.442695
        %v509 = vpow.pop %v508
        %v510 = vmul.f32 %v481, 1.442695
        %v511 = vpow.pop %v510
        %v512 = vmul.f32 %v482, 1.442695
        %v513 = vpow.pop %v512
        %v514 = vmul.f32 %v483, 1.442695
        %v515 = vpow.pop %v514
        %v516 = vadd.f32 %v485, 1.0
        %v517 = vadd.f32 %v487, 1.0
        %v518 = vadd.f32 %v489, 1.0
        %v519 = vadd.f32 %v491, 1.0
        %v520 = vadd.f32 %v493, 1.0
        %v521 = vadd.f32 %v495, 1.0
        %v522 = vadd.f32 %v497, 1.0
        %v523 = vadd.f32 %v499, 1.0
        %v524 = vadd.f32 %v501, 1.0
        %v525 = vadd.f32 %v503, 1.0
        %v526 = vadd.f32 %v505, 1.0
        %v527 = vadd.f32 %v507, 1.0
        %v528 = vadd.f32 %v509, 1.0
        %v529 = vadd.f32 %v511, 1.0
        %v530 = vadd.f32 %v513, 1.0
        %v531 = vadd.f32 %v515, 1.0
        %v532 = vrcp.pop %v516
        %v533 = vmul.f32 1.0, %v532
        %v534 = vrcp.pop %v517
        %v535 = vmul.f32 1.0, %v534
        %v536 = vrcp.pop %v518
        %v537 = vmul.f32 1.0, %v536
        %v538 = vrcp.pop %v519
        %v539 = vmul.f32 1.0, %v538
        %v540 = vrcp.pop %v520
        %v541 = vmul.f32 1.0, %v540
        %v542 = vrcp.pop %v521
        %v543 = vmul.f32 1.0, %v542
        %v544 = vrcp.pop %v522
        %v545 = vmul.f32 1.0, %v544
        %v546 = vrcp.pop %v523
        %v547 = vmul.f32 1.0, %v546
        %v548 = vrcp.pop %v524
        %v549 = vmul.f32 1.0, %v548
        %v550 = vrcp.pop %v525
        %v551 = vmul.f32 1.0, %v550
        %v552 = vrcp.pop %v526
        %v553 = vmul.f32 1.0, %v552
        %v554 = vrcp.pop %v527
        %v555 = vmul.f32 1.0, %v554
        %v556 = vrcp.pop %v528
        %v557 = vmul.f32 1.0, %v556
        %v558 = vrcp.pop %v529
        %v559 = vmul.f32 1.0, %v558
        %v560 = vrcp.pop %v530
        %v561 = vmul.f32 1.0, %v560
        %v562 = vrcp.pop %v531
        %v563 = vmul.f32 1.0, %v562
        %v564 = vsub.f32 %v452, %v207
        %v565 = vsub.f32 %v453, %v208
        %v566 = vsub.f32 %v454, %v209
        %v567 = vsub.f32 %v455, %v210
        %v568 = vsub.f32 %v456, %v211
        %v569 = vsub.f32 %v457, %v212
        %v570 = vsub.f32 %v458, %v213
        %v571 = vsub.f32 %v459, %v214
        %v572 = vsub.f32 %v460, %v215
        %v573 = vsub.f32 %v461, %v216
        %v574 = vsub.f32 %v462, %v217
        %v575 = vsub.f32 %v463, %v218
        %v576 = vsub.f32 %v464, %v219
        %v577 = vsub.f32 %v465, %v220
        %v578 = vsub.f32 %v466, %v221
        %v579 = vsub.f32 %v467, %v222
        %v580 = vmul.f32 %v533, %v564
        %v581 = vmul.f32 %v535, %v565
        %v582 = vmul.f32 %v537, %v566
        %v583 = vmul.f32 %v539, %v567
        %v584 = vmul.f32 %v541, %v568
        %v585 = vmul.f32 %v543, %v569
        %v586 = vmul.f32 %v545, %v570
        %v587 = vmul.f32 %v547, %v571
        %v588 = vmul.f32 %v549, %v572
        %v589 = vmul.f32 %v551, %v573
        %v590 = vmul.f32 %v553, %v574
        %v591 = vmul.f32 %v555, %v575
        %v592 = vmul.f32 %v557, %v576
        %v593 = vmul.f32 %v559, %v577
        %v594 = vmul.f32 %v561, %v578
        %v595 = vmul.f32 %v563, %v579
        %v596 = vadd.f32 %v207, %v580
        %v597 = vadd.f32 %v208, %v581
        %v598 = vadd.f32 %v209, %v582
        %v599 = vadd.f32 %v210, %v583
        %v600 = vadd.f32 %v211, %v584
        %v601 = vadd.f32 %v212, %v585
        %v602 = vadd.f32 %v213, %v586
        %v603 = vadd.f32 %v214, %v587
        %v604 = vadd.f32 %v215, %v588
        %v605 = vadd.f32 %v216, %v589
        %v606 = vadd.f32 %v217, %v590
        %v607 = vadd.f32 %v218, %v591
        %v608 = vadd.f32 %v219, %v592
        %v609 = vadd.f32 %v220, %v593
        %v610 = vadd.f32 %v221, %v594
        %v611 = vadd.f32 %v222, %v595
        %612 = vst [vmem:[%s203] sm:$0xff] %v596
        %613 = vst [vmem:[%s203 + $0x8] sm:$0xff] %v597
        %614 = vst [vmem:[%s203 + $0x10] sm:$0xff] %v598
        %615 = vst [vmem:[%s203 + $0x18] sm:$0xff] %v599
        %616 = vst [vmem:[%s203 + $0x20] sm:$0xff] %v600
        %617 = vst [vmem:[%s203 + $0x28] sm:$0xff] %v601
        %618 = vst [vmem:[%s203 + $0x30] sm:$0xff] %v602
        %619 = vst [vmem:[%s203 + $0x38] sm:$0xff] %v603
        %620 = vst [vmem:[%s203 + $0x40] sm:$0xff] %v604
        %621 = vst [vmem:[%s203 + $0x48] sm:$0xff] %v605
        %622 = vst [vmem:[%s203 + $0x50] sm:$0xff] %v606
        %623 = vst [vmem:[%s203 + $0x58] sm:$0xff] %v607
        %624 = vst [vmem:[%s203 + $0x60] sm:$0xff] %v608
        %625 = vst [vmem:[%s203 + $0x68] sm:$0xff] %v609
        %626 = vst [vmem:[%s203 + $0x70] sm:$0xff] %v610
        %627 = vst [vmem:[%s203 + $0x78] sm:$0xff] %v611
        %s628 = sand.u32 %s97, 1
        %s629 = scalar_lea.sflag [#allocation4], %s628
        %s630 = sand.u32 %s97, 1
        %s631 = smul.addr %s630, 128
        %s632 = scalar_lea.vmem [#allocation7], %s631
        // Predicated region
        $region41: #{tpu_custom_call.1} parent=31 // pred_check
          %p633 = pneg %p107
        $region42: #{tpu_custom_call.1} parent=31 // pred_check_branch
          %635 = sbr.rel (%p633) target = $region44
        $region43: #{tpu_custom_call.1} parent=31 // pred_region
          %s636 = smul.u32 16, %s21
          %s638 = ssub.s32 2048, 2048
          %639 = vsyncadd %s629, %s638
          %s640 = smul.addr %s636, 128
          %s641 = scalar_lea.hbm %s3, %s640
          %s642 = sshll.u32 %s632, 4
          %s643 = int_to_ptr.vmem [resolvable:$true] %s642
          %648 = dma.vmem_to_hbm [thread:$0]  %s643, 2048, %s641, %s629, 128, 128, 8
        $region44: #{tpu_custom_call.1} parent=31 // pred_fallthru
          _
      $region32: #{tpu_custom_call.1} parent=5 // pred_fallthru
        _
      %p649 = scmp.le.s32.totalorder 2, %s16
      // Predicated region
      $region45: #{tpu_custom_call.1} parent=5 // pred_check
        %p650 = pneg %p649
      $region46: #{tpu_custom_call.1} parent=5 // pred_check_branch
        %652 = sbr.rel (%p650) target = $region48
      $region47: #{tpu_custom_call.1} parent=5 // pred_region
        %s653 = ssub.s32 %s16, 2
        // Predicated region
        $region49: #{tpu_custom_call.1} parent=47 // pred_check
          %p654 = pneg %p113
        $region50: #{tpu_custom_call.1} parent=47 // pred_check_branch
          %656 = sbr.rel (%p654) target = $region52
        $region51: #{tpu_custom_call.1} parent=47 // pred_region
          %s657 = sand.u32 %s98, 1
          %s658 = scalar_lea.sflag [#allocation4], %s657
          %s659 = sand.u32 %s98, 1
          %s660 = smul.addr %s659, 128
          %s661 = scalar_lea.vmem [#allocation7], %s660
          %662 = dma.done %s658, 2048
        $region52: #{tpu_custom_call.1} parent=47 // pred_fallthru
          _
      $region48: #{tpu_custom_call.1} parent=5 // pred_fallthru
        _
    $region6: #{tpu_custom_call.1} parent=1 // loop_footer
      %s20 = sadd.s32 1, %s16
    $region7: #{tpu_custom_call.1} parent=1 // loop_footer_branch
      %15 = sbr.rel target = $region3
    $region8: #{tpu_custom_call.1} parent=1 // loop_exit
      _
    %663 = vsyncpa [#allocation3], 1
    %s664 = scalar_lea.sflag [#allocation3], 1
    %665 = vsyncpa %s664, 1
    %666 = vsyncpa [#allocation6], 1
    %667 = vsyncpa [#allocation4], 1
    %s668 = scalar_lea.sflag [#allocation4], 1
    %669 = vsyncpa %s668, 1

</llo_original>
